<compile_context>
chip_gen: v7x
topology: tpu7x:2x2x1
jax: 0.10.0
libtpu: 0.0.40
codegen_flags: <defaults>
</compile_context>

<pallas_src>
import jax
import jax.numpy as jnp
from jax.experimental import pallas as pl
from jax.experimental.pallas import tpu as pltpu


# ---------------------------------------------------------------------------
# Primary: aliased, zero-copy identity (no HBM traffic at all).
# ---------------------------------------------------------------------------
def _noop_alias_kernel(x_ref, o_ref):
    # Output buffer *is* the input buffer (input_output_aliases={0: 0}), so
    # there is nothing to move.  touch() pins a (fake) read/write dependency
    # on the aliased output so the kernel is well-formed.
    pltpu.touch(o_ref)


def _noop_aliased(x: jax.Array) -> jax.Array:
    return pl.pallas_call(
        _noop_alias_kernel,
        out_shape=jax.ShapeDtypeStruct(x.shape, x.dtype),
        in_specs=[pl.BlockSpec(memory_space=pl.ANY)],   # raw HBM ref, no auto-DMA
        out_specs=pl.BlockSpec(memory_space=pl.ANY),    # raw HBM ref, no writeback
        input_output_aliases={0: 0},                    # output buffer == input buffer
    )(x)


# ---------------------------------------------------------------------------
# Fallback: lane-dense, tiled copy (still a bit-exact identity).
# ---------------------------------------------------------------------------
def _copy_kernel(x_ref, o_ref):
    o_ref[...] = x_ref[...]


_LANE = 128
_MAX_TILE_BYTES = 4 * 1024 * 1024  # 4 MiB/tile -> <=16 MiB double-buffered in+out


def _noop_copy(x: jax.Array) -> jax.Array:
    total = int(x.size)
    itemsize = jnp.dtype(x.dtype).itemsize

    # Lane-dense 2D view: make the last dim a multiple of 128 when possible
    # (avoids masked vst.msk partial stores and 16-element DMA strips).
    cols = total
    for cand in (4096, 2048, 1024, 512, 256, _LANE):
        if total % cand == 0:
            cols = cand
            break
    rows = total // cols
    x2d = x.reshape(rows, cols)

    # Row tile: largest power-of-two divisor of `rows` whose block fits the
    # per-tile budget (keeps double-buffered footprint small on v7x's VMEM).
    tr = rows
    for cand in (2048, 1024, 512, 256, 128, 64, 32, 16, 8):
        if rows % cand == 0 and cand * cols * itemsize <= _MAX_TILE_BYTES:
            tr = cand
            break

    out = pl.pallas_call(
        _copy_kernel,
        out_shape=jax.ShapeDtypeStruct((rows, cols), x.dtype),
        grid=(rows // tr,),
        in_specs=[pl.BlockSpec((tr, cols), lambda i: (i, 0))],
        out_specs=pl.BlockSpec((tr, cols), lambda i: (i, 0)),
        compiler_params=pltpu.CompilerParams(
            dimension_semantics=("parallel",)  # lets v7x shard tiles over 2 TCs
        ),
    )(x2d)
    return out.reshape(x.shape)


# ---------------------------------------------------------------------------
# Public wrapper: NoOp.forward(x) -> x
# ---------------------------------------------------------------------------
def noop(x: jax.Array) -> jax.Array:
    """Identity forward pass (NoOp.forward) as a Pallas TPU kernel."""
    try:
        y = _noop_aliased(x)
        jax.block_until_ready(y)  # surface any lowering/runtime issue here
        return y
    except Exception:
        # Aliased zero-copy path unavailable -> lane-dense tiled copy.
        return _noop_copy(x)


if __name__ == "__main__":
    key = jax.random.PRNGKey(0)
    # Small NCHW-style input consistent with a generic forward: (2, 4, 16, 16)
    x = jax.random.normal(key, (2, 4, 16, 16), dtype=jnp.float32)

    y = noop(x)
    y = jax.block_until_ready(y)

    assert y.shape == x.shape, (y.shape, x.shape)
    assert y.dtype == x.dtype, (y.dtype, x.dtype)
    assert bool(jnp.all(y == x)), "NoOp kernel output mismatch"

    print("KERNEL_OK")
</pallas_src>

<mosaic_0001>
module attributes {stable_mosaic.version = 11 : i64} {
  func.func @_noop_alias_kernel(%arg0: memref<2x4x16x16xf32, #tpu.memory_space<any>>, %arg1: memref<2x4x16x16xf32, #tpu.memory_space<any>>) attributes {dimension_semantics = [], scalar_prefetch = 0 : i64, scratch_operands = 0 : i64, tpu.core_type = #tpu.core_type<tc>} {
    return
  }
}

module attributes {stable_mosaic.version = 11 : i64} {
  func.func @_copy_kernel(%arg0: i32, %arg1: memref<1x2048xf32, #tpu.memory_space<vmem>>, %arg2: memref<1x2048xf32, #tpu.memory_space<vmem>>) attributes {dimension_semantics = [#tpu.dimension_semantics<parallel>], iteration_bounds = array<i64: 1>, scalar_prefetch = 0 : i64, scratch_operands = 0 : i64, tpu.core_type = #tpu.core_type<tc>, window_params = [{transform_indices = @transform_0, window_bounds = array<i64: 1, 2048>}, {transform_indices = @transform_1, window_bounds = array<i64: 1, 2048>}]} {
    %c0 = arith.constant 0 : index
    %c0_0 = arith.constant 0 : index
    %0 = vector.load %arg1[%c0, %c0_0] : memref<1x2048xf32, #tpu.memory_space<vmem>>, vector<1x2048xf32>
    %c0_1 = arith.constant 0 : index
    %c0_2 = arith.constant 0 : index
    %1 = vector.load %arg2[%c0_1, %c0_2] : memref<1x2048xf32, #tpu.memory_space<vmem>>, vector<1x2048xf32>
    tpu.vector_store %arg2[%c0_1, %c0_2], %0 {strides = array<i32>} : memref<1x2048xf32, #tpu.memory_space<vmem>>, vector<1x2048xf32>,
    return
  }
  func.func @transform_0(%arg0: i32) -> (i32, i32) {
    %c0_i32 = arith.constant 0 : i32
    %c0_i32_0 = arith.constant 0 : i32
    return %arg0, %c0_i32 : i32, i32
  }
  func.func @transform_1(%arg0: i32) -> (i32, i32) {
    %c0_i32 = arith.constant 0 : i32
    %c0_i32_0 = arith.constant 0 : i32
    return %arg0, %c0_i32 : i32, i32
  }
}

</mosaic_0001>

<llo_original>
// kernel: tpu_custom_call.1
$region0: #{tpu_custom_call.1}
  #allocation0 [shape = 'u32[]', space=smem, size = 0x4, offset = 0x4, fixed_abs, tag = 'smem constant byte address 0x4 - core index']
  #allocation1 [shape = 'u32[144,128]{1,0:T(1,128)}', space=vmem, size = 0x12000, scoped, tag = 'internal scratch']
  %s0 = inlined_call_operand.hbm [shape: f32[2,4,16,16], index: 0, kind: input, shape index: {}, may-alias: {0,1}]
  %s1 = inlined_call_operand.hbm [shape: f32[2,4,16,16], index: 1, kind: output, shape index: {}, may-alias: {0,1}]
  %s2 = sld [smem:[#allocation0]]
  $region2: #{tpu_custom_call.1} parent=0
    _
  %s4 = ssub.s32 1, %s2
  %s5 = scalar_select 0, %s4, %s2

// kernel: tpu_custom_call.1
$region0: #{tpu_custom_call.1}
  #allocation0 [shape = 'u32[]', space=smem, size = 0x4, offset = 0x4, fixed_abs, tag = 'smem constant byte address 0x4 - core index']
  #allocation1 [shape = 'u32[144,128]{1,0:T(1,128)}', space=vmem, size = 0x12000, scoped, tag = 'internal scratch']
  %s0 = inlined_call_operand.hbm [shape: f32[1,2048], index: 0, kind: input, shape index: {}]
  %s1 = inlined_call_operand.hbm [shape: f32[1,2048], index: 1, kind: output, shape index: {}]
  %s2 = sld [smem:[#allocation0]]
  $region18: #{tpu_custom_call.1} parent=0
    _
  %s4 = ssub.s32 1, %s2
  %s5 = scalar_select 0, %s4, %s2
  $region1: #{tpu_custom_call.1} parent=0
    #allocation2 [shape = 'u8[8192]{0}', space=vmem, size = 0x2000, scoped, tag = 'input window, operand 0, single buffered']
    #allocation3 [shape = 's32[1]{0}', space=sflag, size = 0x4, scoped, tag = 'scoped memory for tpu_custom_call.1']
    #allocation4 [shape = 's32[1]{0}', space=sflag, size = 0x4, scoped, tag = 'scoped memory for tpu_custom_call.1']
    #allocation5 [shape = 'u8[8192]{0}', space=vmem, size = 0x2000, scoped, tag = 'output window, operand 0, single buffered']
    %6 = vsyncpa [#allocation3], 0
    %7 = vsyncpa [#allocation4], 0
    // Predicated region
    $region2: #{tpu_custom_call.1} parent=1 // pred_check
      _
    $region3: #{tpu_custom_call.1} parent=1 // pred_check_branch
      %9 = sbr.rel (0) target = $region5
    $region4: #{tpu_custom_call.1} parent=1 // pred_region
      %s11 = ssub.s32 256, 256
      %12 = vsyncadd [#allocation3], %s11
      %s14 = sshll.u32 [#allocation2], 4
      %s15 = int_to_ptr.vmem [resolvable:$true] %s14
      %17 = dma.hbm_to_vmem [thread:$0]  %s0, 256, %s15, [#allocation3]
    $region5: #{tpu_custom_call.1} parent=1 // pred_fallthru
      _
    // Predicated region
    $region6: #{tpu_custom_call.1} parent=1 // pred_check
      _
    $region7: #{tpu_custom_call.1} parent=1 // pred_check_branch
      %19 = sbr.rel (0) target = $region9
    $region8: #{tpu_custom_call.1} parent=1 // pred_region
      %20 = dma.done [#allocation3], 256
    $region9: #{tpu_custom_call.1} parent=1 // pred_fallthru
      _
    %v21 = vld [vmem:[#allocation2] sm:$0xff]
    %v22 = vld [vmem:[#allocation2 + $0x8] sm:$0xff]
    %23 = vst [vmem:[#allocation5] sm:$0xff] %v21
    %24 = vst [vmem:[#allocation5 + $0x8] sm:$0xff] %v22
    // Predicated region
    $region10: #{tpu_custom_call.1} parent=1 // pred_check
      _
    $region11: #{tpu_custom_call.1} parent=1 // pred_check_branch
      %26 = sbr.rel (0) target = $region13
    $region12: #{tpu_custom_call.1} parent=1 // pred_region
      %s28 = ssub.s32 256, 256
      %29 = vsyncadd [#allocation4], %s28
      %s31 = sshll.u32 [#allocation5], 4
      %s32 = int_to_ptr.vmem [resolvable:$true] %s31
      %34 = dma.vmem_to_hbm [thread:$0]  %s32, 256, %s1, [#allocation4]
    $region13: #{tpu_custom_call.1} parent=1 // pred_fallthru
      _
    // Predicated region
    $region14: #{tpu_custom_call.1} parent=1 // pred_check
      _
    $region15: #{tpu_custom_call.1} parent=1 // pred_check_branch
      %36 = sbr.rel (0) target = $region17
    $region16: #{tpu_custom_call.1} parent=1 // pred_region
      %37 = dma.done [#allocation4], 256
    $region17: #{tpu_custom_call.1} parent=1 // pred_fallthru
      _
    %38 = vsyncpa [#allocation3], 1
    %39 = vsyncpa [#allocation4], 1

</llo_original>
